<compile_context>
chip_gen: v7x
topology: tpu7x:2x2x1
jax: 0.10.0
libtpu: 0.0.40
codegen_flags: <defaults>
</compile_context>

<pallas_src>
import jax
import jax.numpy as jnp
from jax import lax
from jax.experimental import pallas as pl
from jax.experimental.pallas import tpu as pltpu

_MIB = 1024 * 1024


def _round_up(x, m):
    return (x + m - 1) // m * m


def _cdiv(a, b):
    return -(-a // b)


# ------------------------------------------------------------------ kernel bodies
def _corr_kernel(a_ref, b_ref, o_ref):
    """out[g, k, m] = sum_c a[g, c, k] * b[g, c, m] (transposed-LHS matmul on MXU).

    a_ref: (BB, C, TM)  lane = k-tile     b_ref: (BB, C, TN)  lane = m-tile
    o_ref: (BB, TM, TN)
    """
    for g in range(a_ref.shape[0]):            # BB is small & static -> unrolled
        o_ref[g] = lax.dot_general(
            a_ref[g], b_ref[g],
            dimension_numbers=(((0,), (0,)), ((), ())),
            preferred_element_type=jnp.float32,
        ).astype(o_ref.dtype)


def _corr_kernel_acc(a_ref, b_ref, o_ref, acc_ref):
    """K-tiled variant for very large c: f32 accumulator, innermost grid axis is K."""
    k = pl.program_id(3)

    @pl.when(k == 0)
    def _():
        acc_ref[...] = jnp.zeros_like(acc_ref)

    for g in range(a_ref.shape[0]):
        acc_ref[g] = acc_ref[g] + lax.dot_general(
            a_ref[g], b_ref[g],
            dimension_numbers=(((0,), (0,)), ((), ())),
            preferred_element_type=jnp.float32,
        )

    @pl.when(k == pl.num_programs(3) - 1)
    def _():
        o_ref[...] = acc_ref[...].astype(o_ref.dtype)


# ------------------------------------------------------------------ configuration
def _vmem_budget():
    """Generation-aware scoped-VMEM limit plus a tile-sizing budget with headroom.

    v5e/v6e have 128 MiB of VMEM per TensorCore, v7x only 64 MiB; tile / residency /
    batch-fusion choices are gated on the real capacity (falling back to the
    v7x-safe 64 MiB assumption when it cannot be queried).
    """
    cap = None
    try:
        info = pltpu.get_tpu_info()
        for name in ("vmem_capacity_bytes", "vmem_bytes", "vmem_size_bytes"):
            cap = getattr(info, name, None)
            if cap:
                break
    except Exception:
        cap = None
    if not cap:
        try:
            kind = jax.devices()[0].device_kind.lower()
            if any(v in kind for v in ("v2", "v3")):
                cap = 16 * _MIB
            elif any(v in kind for v in ("v4", "v5", "v6")):
                cap = 128 * _MIB
            else:
                cap = 64 * _MIB
        except Exception:
            cap = 64 * _MIB
    if cap >= 128 * _MIB:
        limit = 100 * _MIB                                        # v5e / v6e
    else:
        limit = min(max(cap - 16 * _MIB, cap // 2), 48 * _MIB)    # v7x: 48 of 64 MiB
    budget = max(limit - 8 * _MIB, 4 * _MIB)                      # compiler headroom
    return limit, budget


def _tile_candidates(hw):
    """Minimal multiples of 128 covering hw in 1, 2, 3, ... blocks (fewest first)."""
    hw_ceil = _round_up(hw, 128)
    cands = []
    for parts in range(1, hw_ceil // 128 + 1):
        t = _round_up(_cdiv(hw, parts), 128)
        if t not in cands:
            cands.append(t)
    return cands


def _choose_config(hw, c_eff, sub_q, isz, osz, batch, budget):
    """Pick (bb, tm, tn, tk): batch fusion, output tile edges, optional K tile.

    Greedy: largest TM first (mt == 1 kills B re-streaming; the first smaller TM is
    tried with the full-width TN first, which keeps B resident across m via block
    revisiting), then largest TN (big lane-dense output tiles amortize the fixed
    ~0.35 us per-step overhead).  tk is None unless even the smallest full-K tiling
    exceeds the VMEM budget.
    """
    def step_bytes(bb, tm, tn, ck, with_acc):
        byt = 2 * bb * ((tm + tn) * ck * isz + tm * tn * osz)   # double-buffered I/O
        if with_acc:
            byt += bb * tm * tn * 4                              # f32 accumulator
        return byt

    cands = _tile_candidates(hw)

    # 1) Full-K tilings over (m, n).
    for tm in cands:
        for tn in cands:
            if step_bytes(1, tm, tn, c_eff, False) > budget:
                continue
            bb = 1
            if _cdiv(hw, tm) == 1 and _cdiv(hw, tn) == 1:
                # Whole batch element per step: fuse batches to amortize step
                # overhead, keeping >= 2 grid steps for the two v7x TensorCores.
                for cand in (16, 8, 4, 2):
                    if (batch % cand == 0 and batch // cand >= 2
                            and step_bytes(cand, tm, tn, c_eff, False) <= budget):
                        bb = cand
                        break
            return bb, tm, tn, None

    # 2) K-tiled fallback (very large c): f32 accumulator in VMEM.
    hw_ceil = _round_up(hw, 128)
    for edge in sorted({min(512, hw_ceil), min(256, hw_ceil), 128}, reverse=True):
        tm = tn = edge
        avail = budget - step_bytes(1, tm, tn, 0, True)
        if avail <= 0:
            continue
        tk = (avail // (2 * (tm + tn) * isz)) // sub_q * sub_q
        if tk >= sub_q:
            return 1, tm, tn, min(tk, c_eff)
    # Last resort: smallest tiles, minimal K chunk (vmem_limit keeps margin on budget).
    return 1, 128, 128, sub_q


# ------------------------------------------------------------------ public wrapper
def correlation_volume(feature_A, feature_B, *, compute_dtype=None, _budget_bytes=None):
    """Rocco correlation volume: (b,c,h,w) x (b,c,h,w) -> (b, h*w, h, w).

    out[b, k, i, j] = sum_c A[b, c, k % h, k // h] * B[b, c, i, j]

    compute_dtype: optionally cast inputs (e.g. jnp.bfloat16) for 2x MXU rate and
    half the input DMA bytes; accumulation stays f32.  Default keeps the input dtype
    so the torch f32 forward is matched exactly.
    _budget_bytes: test hook forcing smaller tilings (exercises the K-tiled path).
    """
    b, c, h, w = feature_A.shape
    assert feature_B.shape == (b, c, h, w)
    out_dtype = feature_A.dtype
    hw = h * w

    if compute_dtype is not None:
        feature_A = feature_A.astype(compute_dtype)
        feature_B = feature_B.astype(compute_dtype)
    in_dtype = feature_A.dtype
    isz = jnp.dtype(in_dtype).itemsize
    osz = jnp.dtype(out_dtype).itemsize
    sub_q = 8 * max(1, 4 // isz)          # sublane quantum: 8 f32 rows / 16 bf16 rows

    vmem_limit, budget = _vmem_budget()
    if _budget_bytes is not None:
        budget = _budget_bytes

    # ---- operand layout (no hw padding, no de-pad copy) --------------------------
    # Both operands live as (b, c, hw) with hw on the lane axis:
    #   A[b, c, k] with k = w_A*h + h_A   (one cheap spatial-transpose HBM pass)
    #   B[b, c, m] with m = h_B*w + w_B   (pure reshape -> zero extra HBM passes)
    a_in = jnp.transpose(feature_A, (0, 1, 3, 2)).reshape(b, c, hw)
    b_in = feature_B.reshape(b, c, hw)

    c_eff = _round_up(c, sub_q)
    bb, tm, tn, tk = _choose_config(hw, c_eff, sub_q, isz, osz, b, budget)

    # The contraction axis must never see garbage: zero-pad c up to the sublane
    # quantum (full-K path) or to a multiple of tk (K-tiled path).  The hw axes stay
    # unpadded -- partial-block garbage only reaches output rows/cols that Pallas
    # masks on writeback, so it never contaminates valid results.
    c_pad = _round_up(c, sub_q) if tk is None else _round_up(c, tk)
    if c_pad != c:
        a_in = jnp.pad(a_in, ((0, 0), (0, c_pad - c), (0, 0)))
        b_in = jnp.pad(b_in, ((0, 0), (0, c_pad - c), (0, 0)))

    bcount = b // bb
    mt = _cdiv(hw, tm)
    nt = _cdiv(hw, tn)
    kt = 1 if tk is None else c_pad // tk

    # Keep >= 2 parallel grid steps so the second v7x TensorCore is never idle.
    # With nt == 1 this is free: B's block index stays constant across m, so it is
    # still DMA'd only once per batch element.
    if kt == 1 and bcount == 1 and mt == 1 and nt == 1 and hw > 128:
        tm = _round_up(_cdiv(hw, 2), 128)
        mt = _cdiv(hw, tm)

    out_shape = jax.ShapeDtypeStruct((b, hw, hw), out_dtype)

    if tk is None:
        # Grid (batch, m, n), n innermost: the A tile's block index is constant
        # across n (revisited, no re-DMA); whenever mt == 1 or nt == 1, B is never
        # re-streamed either, so each operand crosses HBM exactly once per batch.
        corr = pl.pallas_call(
            _corr_kernel,
            out_shape=out_shape,
            grid=(bcount, mt, nt),
            in_specs=[
                pl.BlockSpec((bb, c_pad, tm), lambda bi, mi, ni: (bi, 0, mi)),
                pl.BlockSpec((bb, c_pad, tn), lambda bi, mi, ni: (bi, 0, ni)),
            ],
            out_specs=pl.BlockSpec((bb, tm, tn), lambda bi, mi, ni: (bi, mi, ni)),
            compiler_params=pltpu.CompilerParams(
                dimension_semantics=("parallel", "parallel", "parallel"),
                vmem_limit_bytes=vmem_limit,
            ),
        )(a_in, b_in)
    else:
        corr = pl.pallas_call(
            _corr_kernel_acc,
            out_shape=out_shape,
            grid=(bcount, mt, nt, kt),
            in_specs=[
                pl.BlockSpec((bb, tk, tm), lambda bi, mi, ni, ki: (bi, ki, mi)),
                pl.BlockSpec((bb, tk, tn), lambda bi, mi, ni, ki: (bi, ki, ni)),
            ],
            out_specs=pl.BlockSpec((bb, tm, tn),
                                   lambda bi, mi, ni, ki: (bi, mi, ni)),
            scratch_shapes=[pltpu.VMEM((bb, tm, tn), jnp.float32)],
            compiler_params=pltpu.CompilerParams(
                dimension_semantics=("parallel", "parallel", "parallel", "arbitrary"),
                vmem_limit_bytes=vmem_limit,
            ),
        )(a_in, b_in)

    # (b, hw, hw)[b, k, m=i*w+j] -> (b, hw, h, w)[b, k, i, j]; pure metadata reshape.
    return corr.reshape(b, hw, h, w)


# ------------------------------------------------------------------ reference + test
def _reference(feature_A, feature_B):
    """Pure-JAX reference following the torch ops exactly."""
    b, c, h, w = feature_A.shape
    fA = jnp.transpose(feature_A, (0, 1, 3, 2)).reshape(b, c, h * w)   # (b, c, hw)
    fB = jnp.transpose(feature_B.reshape(b, c, h * w), (0, 2, 1))       # (b, hw, c)
    mul = jnp.einsum("bmc,bck->bmk", fB, fA,
                     precision=lax.Precision.HIGHEST)                   # (b, hw, hw)
    corr = mul.reshape(b, h, w, h * w)
    corr = jnp.transpose(corr, (0, 1, 3, 2))   # transpose(2,3)
    corr = jnp.transpose(corr, (0, 2, 1, 3))   # transpose(1,2)
    return corr                                 # (b, hw, h, w)


if __name__ == "__main__":
    key = jax.random.PRNGKey(0)
    kA, kB, kC, kD, kE, kF = jax.random.split(key, 6)

    # Case 1: tiny c (zero-padded 4 -> 8), hw = 256 (fully aligned), whole problem
    # per grid step, 2 parallel steps.
    b, c, h, w = 2, 4, 16, 16
    fA = jax.random.normal(kA, (b, c, h, w), dtype=jnp.float32)
    fB = jax.random.normal(kB, (b, c, h, w), dtype=jnp.float32)
    out = jax.block_until_ready(correlation_volume(fA, fB))
    ref = _reference(fA, fB)
    assert out.shape == (b, h * w, h, w), out.shape
    assert jnp.allclose(out, ref, atol=1e-4, rtol=1e-4), "case1 mismatch vs reference"

    # Case 2: unaligned hw (7*9 = 63 -> masked partial blocks, no padding / no
    # de-pad copy), c = 128 (no c pad, B is a pure reshape), odd batch.
    b2, c2, h2, w2 = 3, 128, 7, 9
    gA = jax.random.normal(kC, (b2, c2, h2, w2), dtype=jnp.float32)
    gB = jax.random.normal(kD, (b2, c2, h2, w2), dtype=jnp.float32)
    out2 = jax.block_until_ready(correlation_volume(gA, gB))
    ref2 = _reference(gA, gB)
    assert out2.shape == (b2, h2 * w2, h2, w2), out2.shape
    assert jnp.allclose(out2, ref2, atol=1e-3, rtol=1e-3), "case2 mismatch vs reference"

    # Case 3: force the K-tiled accumulator path with an artificially small budget
    # (c gets zero-padded to a multiple of tk; contraction accumulates in f32 VMEM).
    b3, c3, h3, w3 = 1, 96, 8, 9
    hA = jax.random.normal(kE, (b3, c3, h3, w3), dtype=jnp.float32)
    hB = jax.random.normal(kF, (b3, c3, h3, w3), dtype=jnp.float32)
    out3 = jax.block_until_ready(
        correlation_volume(hA, hB, _budget_bytes=280 * 1024))
    ref3 = _reference(hA, hB)
    assert out3.shape == (b3, h3 * w3, h3, w3), out3.shape
    assert jnp.allclose(out3, ref3, atol=1e-3, rtol=1e-3), "case3 mismatch vs reference"

    print("KERNEL_OK")
</pallas_src>

<mosaic_0001>
module attributes {stable_mosaic.version = 11 : i64} {
  func.func @_corr_kernel(%arg0: i32, %arg1: i32, %arg2: i32, %arg3: memref<1x8x256xf32, #tpu.memory_space<vmem>>, %arg4: memref<1x8x256xf32, #tpu.memory_space<vmem>>, %arg5: memref<1x256x256xf32, #tpu.memory_space<vmem>>) attributes {dimension_semantics = [#tpu.dimension_semantics<parallel>, #tpu.dimension_semantics<parallel>, #tpu.dimension_semantics<parallel>], iteration_bounds = array<i64: 2, 1, 1>, scalar_prefetch = 0 : i64, scratch_operands = 0 : i64, tpu.core_type = #tpu.core_type<tc>, window_params = [{transform_indices = @transform_0, window_bounds = array<i64: 1, 8, 256>}, {transform_indices = @transform_1, window_bounds = array<i64: 1, 8, 256>}, {transform_indices = @transform_2, window_bounds = array<i64: 1, 256, 256>}]} {
    %c0 = arith.constant 0 : index
    %c0_0 = arith.constant 0 : index
    %c0_1 = arith.constant 0 : index
    %0 = vector.load %arg3[%c0, %c0_0, %c0_1] : memref<1x8x256xf32, #tpu.memory_space<vmem>>, vector<1x8x256xf32>
    %1 = vector.shape_cast %0 : vector<1x8x256xf32> to vector<8x256xf32>
    %c0_2 = arith.constant 0 : index
    %c0_3 = arith.constant 0 : index
    %c0_4 = arith.constant 0 : index
    %2 = vector.load %arg4[%c0_2, %c0_3, %c0_4] : memref<1x8x256xf32, #tpu.memory_space<vmem>>, vector<1x8x256xf32>
    %3 = vector.shape_cast %2 : vector<1x8x256xf32> to vector<8x256xf32>
    %cst = arith.constant dense<0.000000e+00> : vector<256x256xf32>
    %4 = tpu.matmul %1, %3, %cst {dimension_numbers = #tpu.dot_dimension_numbers<[0], [0], [1], [1], [0, 1, 1, 1], [], []>} : vector<8x256xf32>, vector<8x256xf32>, vector<256x256xf32> -> vector<256x256xf32>
    %c0_5 = arith.constant 0 : index
    %c0_6 = arith.constant 0 : index
    %c0_7 = arith.constant 0 : index
    %5 = vector.load %arg5[%c0_5, %c0_6, %c0_7] : memref<1x256x256xf32, #tpu.memory_space<vmem>>, vector<1x256x256xf32>
    %6 = vector.shape_cast %5 : vector<1x256x256xf32> to vector<256x256xf32>
    %7 = vector.shape_cast %4 : vector<256x256xf32> to vector<1x256x256xf32>
    tpu.vector_store %arg5[%c0_5, %c0_6, %c0_7], %7 {strides = array<i32>} : memref<1x256x256xf32, #tpu.memory_space<vmem>>, vector<1x256x256xf32>,
    return
  }
  func.func @transform_0(%arg0: i32, %arg1: i32, %arg2: i32) -> (i32, i32, i32) {
    %c0_i32 = arith.constant 0 : i32
    %c0_i32_0 = arith.constant 0 : i32
    return %arg0, %c0_i32, %arg1 : i32, i32, i32
  }
  func.func @transform_1(%arg0: i32, %arg1: i32, %arg2: i32) -> (i32, i32, i32) {
    %c0_i32 = arith.constant 0 : i32
    %c0_i32_0 = arith.constant 0 : i32
    return %arg0, %c0_i32, %arg2 : i32, i32, i32
  }
  func.func @transform_2(%arg0: i32, %arg1: i32, %arg2: i32) -> (i32, i32, i32) {
    %c0_i32 = arith.constant 0 : i32
    return %arg0, %arg1, %arg2 : i32, i32, i32
  }
}

</mosaic_0001>

<llo_original>
// kernel: tpu_custom_call.1
$region0: #{tpu_custom_call.1}
  #allocation0 [shape = 'u32[]', space=smem, size = 0x4, offset = 0x4, fixed_abs, tag = 'smem constant byte address 0x4 - core index']
  #allocation1 [shape = 'u32[144,128]{1,0:T(1,128)}', space=vmem, size = 0x12000, scoped, tag = 'internal scratch']
  %s0 = inlined_call_operand.hbm [shape: f32[2,8,256], index: 0, kind: input, shape index: {}]
  %s1 = inlined_call_operand.hbm [shape: f32[2,8,256], index: 1, kind: input, shape index: {}]
  %s2 = inlined_call_operand.hbm [shape: f32[2,256,256], index: 2, kind: output, shape index: {}]
  %s3 = sld [smem:[#allocation0]]
  $region49: #{tpu_custom_call.1} parent=0
    _
  %s5 = ssub.s32 1, %s3
  %s6 = scalar_select 0, %s5, %s3
  $region1: #{tpu_custom_call.1} parent=0
    #allocation2 [shape = 'u8[16384]{0}', space=vmem, size = 0x4000, scoped, tag = 'input window, operand 0']
    #allocation3 [shape = 's32[2]{0}', space=sflag, size = 0x8, scoped, tag = 'scoped memory for tpu_custom_call.1']
    #allocation4 [shape = 's32[2]{0}', space=sflag, size = 0x8, scoped, tag = 'scoped memory for tpu_custom_call.1']
    #allocation5 [shape = 'u8[16384]{0}', space=vmem, size = 0x4000, scoped, tag = 'input window, operand 1']
    #allocation6 [shape = 's32[2]{0}', space=sflag, size = 0x8, scoped, tag = 'scoped memory for tpu_custom_call.1']
    #allocation7 [shape = 'u8[524288]{0}', space=vmem, size = 0x80000, scoped, tag = 'output window, operand 0']
    %7 = vsyncpa [#allocation3], 0
    %s8 = scalar_lea.sflag [#allocation3], 1
    %9 = vsyncpa %s8, 0
    %10 = vsyncpa [#allocation6], 0
    %s11 = scalar_lea.sflag [#allocation6], 1
    %12 = vsyncpa %s11, 0
    %13 = vsyncpa [#allocation4], 0
    %s14 = scalar_lea.sflag [#allocation4], 1
    %15 = vsyncpa %s14, 0
    loop: start=0, step=1, limit=4
    $region2: #{tpu_custom_call.1} parent=1 // loop_pre_header
      _
    $region3: #{tpu_custom_call.1} parent=1 // loop_header
      %s17 = sphi 0, %s21
      %p18 = scmp.ge.s32.totalorder %s17, 4
      %s24 = sphi 0, %s43
      %s25 = sphi 0, %s39
      %s26 = sphi 0, %s35
      %s27 = sphi 0, %s24
      %s28 = sphi 0, %s25
      %s29 = sphi 0, %s26
      %s30 = sphi 0, %s27
      %s31 = sphi 0, %s28
      %s32 = sphi 0, %s29
      %s48 = sphi 0, %s50
      %s51 = sphi 0, %s48
      %s52 = sphi 0, %s51
      %s68 = sphi 0, %s52
      %s76 = sphi 0, %s78
      %s79 = sphi 0, %s76
      %s80 = sphi 0, %s79
      %s96 = sphi 0, %s80
      %s106 = sphi 0, %s108
      %s109 = sphi 0, %s106
      %s110 = sphi 0, %s109
      %s126 = sphi 0, %s110
    $region4: #{tpu_custom_call.1} parent=1 // loop_header_branch
      %20 = sbr.rel (%p18) target = $region8
    $region5: #{tpu_custom_call.1} parent=1 // loop_body
      %s22 = ssub.s32 %s17, 1
      %s23 = ssub.s32 %s17, 2
      %s33 = sadd.s32 1, %s26
      %p34 = scmp.ge.s32.totalorder %s33, 1
      %s35 = scalar_select %p34, 0, %s33
      %s36 = sadd.s32 1, %s25
      %s37 = scalar_select %p34, %s36, %s25
      %p38 = scmp.ge.s32.totalorder %s37, 1
      %s39 = scalar_select %p38, 0, %s37
      %s40 = sadd.s32 1, %s24
      %s41 = scalar_select %p38, %s40, %s24
      %p42 = scmp.ge.s32.totalorder %s41, 2
      %s43 = scalar_select %p42, 0, %s41
      %s44 = ssub.s32 %s24, %s43
      %s45 = ssub.s32 %s25, %s39
      %s46 = sor.u32 %s44, %s45
      %p47 = scmp.eq.s32.totalorder %s46, 0
      %s49 = sadd.s32 %s48, 1
      %s50 = scalar_select %p47, %s48, %s49
      %p53 = pneg %p47
      %p54 = scmp.eq.s32.totalorder %s17, 1
      %p55 = por %p53, %p54
      %p56 = scmp.ne.s32.totalorder %s48, %s51
      %p57 = scmp.eq.s32.totalorder %s17, 0
      %p58 = por %p56, %p57
      %p59 = scmp.ne.s32.totalorder %s48, %s51
      %p60 = scmp.eq.s32.totalorder %s22, 1
      %p61 = por %p59, %p60
      %p62 = scmp.ne.s32.totalorder %s51, %s52
      %p63 = scmp.eq.s32.totalorder %s22, 0
      %p64 = por %p62, %p63
      %p65 = scmp.ne.s32.totalorder %s51, %s52
      %p66 = scmp.eq.s32.totalorder %s23, 1
      %p67 = por %p65, %p66
      %p69 = scmp.ne.s32.totalorder %s52, %s68
      %p70 = scmp.eq.s32.totalorder %s23, 0
      %p71 = por %p69, %p70
      %s72 = ssub.s32 %s24, %s43
      %s73 = ssub.s32 %s26, %s35
      %s74 = sor.u32 %s72, %s73
      %p75 = scmp.eq.s32.totalorder %s74, 0
      %s77 = sadd.s32 %s76, 1
      %s78 = scalar_select %p75, %s76, %s77
      %p81 = pneg %p75
      %p82 = scmp.eq.s32.totalorder %s17, 1
      %p83 = por %p81, %p82
      %p84 = scmp.ne.s32.totalorder %s76, %s79
      %p85 = scmp.eq.s32.totalorder %s17, 0
      %p86 = por %p84, %p85
      %p87 = scmp.ne.s32.totalorder %s76, %s79
      %p88 = scmp.eq.s32.totalorder %s22, 1
      %p89 = por %p87, %p88
      %p90 = scmp.ne.s32.totalorder %s79, %s80
      %p91 = scmp.eq.s32.totalorder %s22, 0
      %p92 = por %p90, %p91
      %p93 = scmp.ne.s32.totalorder %s79, %s80
      %p94 = scmp.eq.s32.totalorder %s23, 1
      %p95 = por %p93, %p94
      %p97 = scmp.ne.s32.totalorder %s80, %s96
      %p98 = scmp.eq.s32.totalorder %s23, 0
      %p99 = por %p97, %p98
      %s100 = ssub.s32 %s24, %s43
      %s101 = ssub.s32 %s25, %s39
      %s102 = sor.u32 %s100, %s101
      %s103 = ssub.s32 %s26, %s35
      %s104 = sor.u32 %s102, %s103
      %p105 = scmp.eq.s32.totalorder %s104, 0
      %s107 = sadd.s32 %s106, 1
      %s108 = scalar_select %p105, %s106, %s107
      %p111 = pneg %p105
      %p112 = scmp.eq.s32.totalorder %s17, 1
      %p113 = por %p111, %p112
      %p114 = scmp.ne.s32.totalorder %s106, %s109
      %p115 = scmp.eq.s32.totalorder %s17, 0
      %p116 = por %p114, %p115
      %p117 = scmp.ne.s32.totalorder %s106, %s109
      %p118 = scmp.eq.s32.totalorder %s22, 1
      %p119 = por %p117, %p118
      %p120 = scmp.ne.s32.totalorder %s109, %s110
      %p121 = scmp.eq.s32.totalorder %s22, 0
      %p122 = por %p120, %p121
      %p123 = scmp.ne.s32.totalorder %s109, %s110
      %p124 = scmp.eq.s32.totalorder %s23, 1
      %p125 = por %p123, %p124
      %p127 = scmp.ne.s32.totalorder %s110, %s126
      %p128 = scmp.eq.s32.totalorder %s23, 0
      %p129 = por %p127, %p128
      %p130 = scmp.le.s32.totalorder 1, %s17
      %p131 = scmp.lt.s32.totalorder %s17, 3
      %p132 = pnand %p130, %p131
      %p133 = pneg %p132
      // Predicated region
      $region9: #{tpu_custom_call.1} parent=5 // pred_check
        _
      $region10: #{tpu_custom_call.1} parent=5 // pred_check_branch
        %135 = sbr.rel (%p132) target = $region12
      $region11: #{tpu_custom_call.1} parent=5 // pred_region
        %s136 = ssub.s32 %s17, 1
      $region12: #{tpu_custom_call.1} parent=5 // pred_fallthru
        _
      %p137 = scmp.lt.s32.totalorder %s17, 2
      // Predicated region
      $region13: #{tpu_custom_call.1} parent=5 // pred_check
        %p138 = pneg %p137
      $region14: #{tpu_custom_call.1} parent=5 // pred_check_branch
        %140 = sbr.rel (%p138) target = $region16
      $region15: #{tpu_custom_call.1} parent=5 // pred_region
        // Predicated region
        $region17: #{tpu_custom_call.1} parent=15 // pred_check
          %p141 = pneg %p58
        $region18: #{tpu_custom_call.1} parent=15 // pred_check_branch
          %143 = sbr.rel (%p141) target = $region20
        $region19: #{tpu_custom_call.1} parent=15 // pred_region
          %s144 = sand.u32 %s48, 1
          %s145 = scalar_lea.sflag [#allocation3], %s144
          %s146 = sand.u32 %s48, 1
          %s147 = smul.addr %s146, 16
          %s148 = scalar_lea.vmem [#allocation2], %s147
          %s149 = smul.u32 2, %s25
          %s151 = ssub.s32 256, 256
          %152 = vsyncadd %s145, %s151
          %s153 = smul.addr %s24, 2
          %s154 = sadd.s32 %s149, %s153
          %s155 = smul.addr %s154, 128
          %s156 = scalar_lea.hbm %s0, %s155
          %s158 = sshll.u32 %s148, 4
          %s159 = int_to_ptr.vmem [resolvable:$true] %s158
          %161 = dma.hbm_to_vmem [thread:$0]  %s156, 256, %s159, %s145
        $region20: #{tpu_custom_call.1} parent=15 // pred_fallthru
          _
        // Predicated region
        $region21: #{tpu_custom_call.1} parent=15 // pred_check
          %p162 = pneg %p86
        $region22: #{tpu_custom_call.1} parent=15 // pred_check_branch
          %164 = sbr.rel (%p162) target = $region24
        $region23: #{tpu_custom_call.1} parent=15 // pred_region
          %s165 = sand.u32 %s76, 1
          %s166 = scalar_lea.sflag [#allocation6], %s165
          %s167 = sand.u32 %s76, 1
          %s168 = smul.addr %s167, 16
          %s169 = scalar_lea.vmem [#allocation5], %s168
          %s170 = smul.u32 2, %s26
          %s172 = ssub.s32 256, 256
          %173 = vsyncadd %s166, %s172
          %s174 = smul.addr %s24, 2
          %s175 = sadd.s32 %s170, %s174
          %s176 = smul.addr %s175, 128
          %s177 = scalar_lea.hbm %s1, %s176
          %s179 = sshll.u32 %s169, 4
          %s180 = int_to_ptr.vmem [resolvable:$true] %s179
          %182 = dma.hbm_to_vmem [thread:$0]  %s177, 256, %s180, %s166
        $region24: #{tpu_custom_call.1} parent=15 // pred_fallthru
          _
      $region16: #{tpu_custom_call.1} parent=5 // pred_fallthru
        _
      %p183 = scmp.le.s32.totalorder 1, %s17
      %p184 = scmp.lt.s32.totalorder %s17, 3
      %p185 = pnand %p183, %p184
      %p186 = pneg %p185
      // Predicated region
      $region25: #{tpu_custom_call.1} parent=5 // pred_check
        _
      $region26: #{tpu_custom_call.1} parent=5 // pred_check_branch
        %188 = sbr.rel (%p185) target = $region28
      $region27: #{tpu_custom_call.1} parent=5 // pred_region
        %s189 = ssub.s32 %s17, 1
        %s190 = sand.u32 %s51, 1
        %s191 = scalar_lea.sflag [#allocation3], %s190
        %s192 = sand.u32 %s51, 1
        %s193 = smul.addr %s192, 16
        %s194 = scalar_lea.vmem [#allocation2], %s193
        // Predicated region
        $region29: #{tpu_custom_call.1} parent=27 // pred_check
          %p195 = pneg %p64
        $region30: #{tpu_custom_call.1} parent=27 // pred_check_branch
          %197 = sbr.rel (%p195) target = $region32
        $region31: #{tpu_custom_call.1} parent=27 // pred_region
          %198 = dma.done %s191, 256
        $region32: #{tpu_custom_call.1} parent=27 // pred_fallthru
          _
        %s199 = sand.u32 %s79, 1
        %s200 = scalar_lea.sflag [#allocation6], %s199
        %s201 = sand.u32 %s79, 1
        %s202 = smul.addr %s201, 16
        %s203 = scalar_lea.vmem [#allocation5], %s202
        // Predicated region
        $region33: #{tpu_custom_call.1} parent=27 // pred_check
          %p204 = pneg %p92
        $region34: #{tpu_custom_call.1} parent=27 // pred_check_branch
          %206 = sbr.rel (%p204) target = $region36
        $region35: #{tpu_custom_call.1} parent=27 // pred_region
          %207 = dma.done %s200, 256
        $region36: #{tpu_custom_call.1} parent=27 // pred_fallthru
          _
        %s208 = sand.u32 %s51, 1
        %s209 = scalar_lea.sflag [#allocation3], %s208
        %s210 = sand.u32 %s51, 1
        %s211 = smul.addr %s210, 16
        %s212 = scalar_lea.vmem [#allocation2], %s211
        %p213 = pneg %p64
        %p214 = pneg %p61
        %s215 = sand.u32 %s79, 1
        %s216 = scalar_lea.sflag [#allocation6], %s215
        %s217 = sand.u32 %s79, 1
        %s218 = smul.addr %s217, 16
        %s219 = scalar_lea.vmem [#allocation5], %s218
        %p220 = pneg %p92
        %p221 = pneg %p89
        %p222 = pneg %p122
        %p223 = pneg %p119
        %s224 = sand.u32 %s109, 1
        %s225 = scalar_lea.sflag [#allocation4], %s224
        %s226 = sand.u32 %s109, 1
        %s227 = smul.addr %s226, 512
        %s228 = scalar_lea.vmem [#allocation7], %s227
        %s229 = smul.u32 2, %s28
        %s230 = smul.u32 2, %s29
        %s231 = smul.u32 32, %s28
        %s232 = smul.u32 2, %s29
        %v233 = vld [vmem:[%s194] sm:$0xff]
        %v234 = vld [vmem:[%s194 + $0x8] sm:$0xff]
        %v235 = vld [vmem:[%s203] sm:$0xff]
        %v236 = vld [vmem:[%s203 + $0x8] sm:$0xff]
        %237 = vxpose.xlu0.b32.start [1/16] %v233, 128
        %238 = vxpose.xlu0.b32.cont [2/16] 0.0, 128
        %239 = vxpose.xlu0.b32.cont [3/16] 0.0, 128
        %240 = vxpose.xlu0.b32.cont [4/16] 0.0, 128
        %241 = vxpose.xlu0.b32.cont [5/16] 0.0, 128
        %242 = vxpose.xlu0.b32.cont [6/16] 0.0, 128
        %243 = vxpose.xlu0.b32.cont [7/16] 0.0, 128
        %244 = vxpose.xlu0.b32.cont [8/16] 0.0, 128
        %245 = vxpose.xlu0.b32.cont [9/16] 0.0, 128
        %246 = vxpose.xlu0.b32.cont [10/16] 0.0, 128
        %247 = vxpose.xlu0.b32.cont [11/16] 0.0, 128
        %248 = vxpose.xlu0.b32.cont [12/16] 0.0, 128
        %249 = vxpose.xlu0.b32.cont [13/16] 0.0, 128
        %250 = vxpose.xlu0.b32.cont [14/16] 0.0, 128
        %251 = vxpose.xlu0.b32.cont [15/16] 0.0, 128
        %252 = vxpose.xlu0.b32.end [16/16] 0.0, 128
        %v253 = vpop.trf.xlu0
        %v254 = vpop.trf.xlu0
        %v255 = vpop.trf.xlu0
        %v256 = vpop.trf.xlu0
        %v257 = vpop.trf.xlu0
        %v258 = vpop.trf.xlu0
        %v259 = vpop.trf.xlu0
        %v260 = vpop.trf.xlu0
        %v261 = vpop.trf.xlu0
        %v262 = vpop.trf.xlu0
        %v263 = vpop.trf.xlu0
        %v264 = vpop.trf.xlu0
        %v265 = vpop.trf.xlu0
        %v266 = vpop.trf.xlu0
        %v267 = vpop.trf.xlu0
        %v268 = vpop.trf.xlu0
        %269 = vxpose.xlu0.b32.start [1/16] %v234, 128
        %270 = vxpose.xlu0.b32.cont [2/16] 0.0, 128
        %271 = vxpose.xlu0.b32.cont [3/16] 0.0, 128
        %272 = vxpose.xlu0.b32.cont [4/16] 0.0, 128
        %273 = vxpose.xlu0.b32.cont [5/16] 0.0, 128
        %274 = vxpose.xlu0.b32.cont [6/16] 0.0, 128
        %275 = vxpose.xlu0.b32.cont [7/16] 0.0, 128
        %276 = vxpose.xlu0.b32.cont [8/16] 0.0, 128
        %277 = vxpose.xlu0.b32.cont [9/16] 0.0, 128
        %278 = vxpose.xlu0.b32.cont [10/16] 0.0, 128
        %279 = vxpose.xlu0.b32.cont [11/16] 0.0, 128
        %280 = vxpose.xlu0.b32.cont [12/16] 0.0, 128
        %281 = vxpose.xlu0.b32.cont [13/16] 0.0, 128
        %282 = vxpose.xlu0.b32.cont [14/16] 0.0, 128
        %283 = vxpose.xlu0.b32.cont [15/16] 0.0, 128
        %284 = vxpose.xlu0.b32.end [16/16] 0.0, 128
        %v285 = vpop.trf.xlu0
        %v286 = vpop.trf.xlu0
        %v287 = vpop.trf.xlu0
        %v288 = vpop.trf.xlu0
        %v289 = vpop.trf.xlu0
        %v290 = vpop.trf.xlu0
        %v291 = vpop.trf.xlu0
        %v292 = vpop.trf.xlu0
        %v293 = vpop.trf.xlu0
        %v294 = vpop.trf.xlu0
        %v295 = vpop.trf.xlu0
        %v296 = vpop.trf.xlu0
        %v297 = vpop.trf.xlu0
        %v298 = vpop.trf.xlu0
        %v299 = vpop.trf.xlu0
        %v300 = vpop.trf.xlu0
        %vm301 = vcmask 64512
        %v303 = vsel %vm301, %v253, 0
        %v306 = vsel %vm301, %v254, 0
        %v309 = vsel %vm301, %v255, 0
        %v312 = vsel %vm301, %v256, 0
        %v315 = vsel %vm301, %v257, 0
        %v318 = vsel %vm301, %v258, 0
        %v321 = vsel %vm301, %v259, 0
        %v324 = vsel %vm301, %v260, 0
        %v327 = vsel %vm301, %v261, 0
        %v330 = vsel %vm301, %v262, 0
        %v333 = vsel %vm301, %v263, 0
        %v336 = vsel %vm301, %v264, 0
        %v339 = vsel %vm301, %v265, 0
        %v342 = vsel %vm301, %v266, 0
        %v345 = vsel %vm301, %v267, 0
        %v348 = vsel %vm301, %v268, 0
        %v351 = vsel %vm301, %v285, 0
        %v354 = vsel %vm301, %v286, 0
        %v357 = vsel %vm301, %v287, 0
        %v360 = vsel %vm301, %v288, 0
        %v363 = vsel %vm301, %v289, 0
        %v366 = vsel %vm301, %v290, 0
        %v369 = vsel %vm301, %v291, 0
        %v372 = vsel %vm301, %v292, 0
        %v375 = vsel %vm301, %v293, 0
        %v378 = vsel %vm301, %v294, 0
        %v381 = vsel %vm301, %v295, 0
        %v384 = vsel %vm301, %v296, 0
        %v387 = vsel %vm301, %v297, 0
        %v390 = vsel %vm301, %v298, 0
        %v393 = vsel %vm301, %v299, 0
        %v396 = vsel %vm301, %v300, 0
        %398 = vmatprep.subr.mxu0 %v236
        %399 = vmatpush1.msra.mxu0 %v235
        %400 = vmatprep.subr.mxu0 0.0
        %401 = vmatpush1.msra.mxu0 0.0
        %402 = vmatprep.subr.mxu0 0.0
        %403 = vmatpush1.msra.mxu0 0.0
        %404 = vmatprep.subr.mxu0 0.0
        %405 = vmatpush1.msra.mxu0 0.0
        %406 = vmatprep.subr.mxu0 0.0
        %407 = vmatpush1.msra.mxu0 0.0
        %408 = vmatprep.subr.mxu0 0.0
        %409 = vmatpush1.msra.mxu0 0.0
        %410 = vmatprep.subr.mxu0 0.0
        %411 = vmatpush1.msra.mxu0 0.0
        %412 = vmatprep.subr.mxu0 0.0
        %413 = vmatpush1.msra.mxu0 0.0
        %414 = vmatprep.subr.mxu0 0.0
        %415 = vmatpush1.msra.mxu0 0.0
        %416 = vmatprep.subr.mxu0 0.0
        %417 = vmatpush1.msra.mxu0 0.0
        %418 = vmatprep.subr.mxu0 0.0
        %419 = vmatpush1.msra.mxu0 0.0
        %420 = vmatprep.subr.mxu0 0.0
        %421 = vmatpush1.msra.mxu0 0.0
        %422 = vmatprep.subr.mxu0 0.0
        %423 = vmatpush1.msra.mxu0 0.0
        %424 = vmatprep.subr.mxu0 0.0
        %425 = vmatpush1.msra.mxu0 0.0
        %426 = vmatprep.subr.mxu0 0.0
        %427 = vmatpush1.msra.mxu0 0.0
        %428 = vmatprep.subr.mxu0 0.0
        %429 = vmatpush1.msra.mxu0 0.0
        %430 = vmatprep.subr.mxu0 0.0
        %431 = vmatpush1.msra.mxu0 0.0
        %432 = vmatprep.subr.mxu0 0.0
        %433 = vmatpush1.msra.mxu0 0.0
        %434 = vmatprep.subr.mxu0 0.0
        %435 = vmatpush1.msra.mxu0 0.0
        %436 = vmatprep.subr.mxu0 0.0
        %437 = vmatpush1.msra.mxu0 0.0
        %438 = vmatprep.subr.mxu0 0.0
        %439 = vmatpush1.msra.mxu0 0.0
        %440 = vmatprep.subr.mxu0 0.0
        %441 = vmatpush1.msra.mxu0 0.0
        %442 = vmatprep.subr.mxu0 0.0
        %443 = vmatpush1.msra.mxu0 0.0
        %444 = vmatprep.subr.mxu0 0.0
        %445 = vmatpush1.msra.mxu0 0.0
        %446 = vmatprep.subr.mxu0 0.0
        %447 = vmatpush1.msra.mxu0 0.0
        %448 = vmatprep.subr.mxu0 0.0
        %449 = vmatpush1.msra.mxu0 0.0
        %450 = vmatprep.subr.mxu0 0.0
        %451 = vmatpush1.msra.mxu0 0.0
        %452 = vmatprep.subr.mxu0 0.0
        %453 = vmatpush1.msra.mxu0 0.0
        %454 = vmatprep.subr.mxu0 0.0
        %455 = vmatpush1.msra.mxu0 0.0
        %456 = vmatprep.subr.mxu0 0.0
        %457 = vmatpush1.msra.mxu0 0.0
        %458 = vmatprep.subr.mxu0 0.0
        %459 = vmatpush1.msra.mxu0 0.0
        %460 = vmatprep.subr.mxu0 0.0
        %461 = vmatpush1.msra.mxu0 0.0
        %462 = vmatprep.mubr.f32.mxu0 0.0
        %463 = vmatmul.mubr.f32.gmra.mrb[0].mxu0 %v303
        %v464 = vpop.f32.mrb[0].mxu0
        %v465 = vadd.f32 0.0, %v464
        %v466 = vpop.f32.mrb[0].mxu0
        %v467 = vadd.f32 0.0, %v466
        %468 = vmatprep.mubr.f32.mxu0 0.0
        %469 = vmatmul.mubr.f32.gmra.mrb[0].mxu0 %v306
        %v470 = vpop.f32.mrb[0].mxu0
        %v471 = vadd.f32 0.0, %v470
        %v472 = vpop.f32.mrb[0].mxu0
        %v473 = vadd.f32 0.0, %v472
        %474 = vmatprep.mubr.f32.mxu0 0.0
        %475 = vmatmul.mubr.f32.gmra.mrb[0].mxu0 %v309
        %v476 = vpop.f32.mrb[0].mxu0
        %v477 = vadd.f32 0.0, %v476
        %v478 = vpop.f32.mrb[0].mxu0
        %v479 = vadd.f32 0.0, %v478
        %480 = vmatprep.mubr.f32.mxu0 0.0
        %481 = vmatmul.mubr.f32.gmra.mrb[0].mxu0 %v312
        %v482 = vpop.f32.mrb[0].mxu0
        %v483 = vadd.f32 0.0, %v482
        %v484 = vpop.f32.mrb[0].mxu0
        %v485 = vadd.f32 0.0, %v484
        %486 = vmatprep.mubr.f32.mxu0 0.0
        %487 = vmatmul.mubr.f32.gmra.mrb[0].mxu0 %v315
        %v488 = vpop.f32.mrb[0].mxu0
        %v489 = vadd.f32 0.0, %v488
        %v490 = vpop.f32.mrb[0].mxu0
        %v491 = vadd.f32 0.0, %v490
        %492 = vmatprep.mubr.f32.mxu0 0.0
        %493 = vmatmul.mubr.f32.gmra.mrb[0].mxu0 %v318
        %v494 = vpop.f32.mrb[0].mxu0
        %v495 = vadd.f32 0.0, %v494
        %v496 = vpop.f32.mrb[0].mxu0
        %v497 = vadd.f32 0.0, %v496
        %498 = vmatprep.mubr.f32.mxu0 0.0
        %499 = vmatmul.mubr.f32.gmra.mrb[0].mxu0 %v321
        %v500 = vpop.f32.mrb[0].mxu0
        %v501 = vadd.f32 0.0, %v500
        %v502 = vpop.f32.mrb[0].mxu0
        %v503 = vadd.f32 0.0, %v502
        %504 = vmatprep.mubr.f32.mxu0 0.0
        %505 = vmatmul.mubr.f32.gmra.mrb[0].mxu0 %v324
        %v506 = vpop.f32.mrb[0].mxu0
        %v507 = vadd.f32 0.0, %v506
        %v508 = vpop.f32.mrb[0].mxu0
        %v509 = vadd.f32 0.0, %v508
        %510 = vmatprep.mubr.f32.mxu0 0.0
        %511 = vmatmul.mubr.f32.gmra.mrb[0].mxu0 %v327
        %v512 = vpop.f32.mrb[0].mxu0
        %v513 = vadd.f32 0.0, %v512
        %v514 = vpop.f32.mrb[0].mxu0
        %v515 = vadd.f32 0.0, %v514
        %516 = vmatprep.mubr.f32.mxu0 0.0
        %517 = vmatmul.mubr.f32.gmra.mrb[0].mxu0 %v330
        %v518 = vpop.f32.mrb[0].mxu0
        %v519 = vadd.f32 0.0, %v518
        %v520 = vpop.f32.mrb[0].mxu0
        %v521 = vadd.f32 0.0, %v520
        %522 = vmatprep.mubr.f32.mxu0 0.0
        %523 = vmatmul.mubr.f32.gmra.mrb[0].mxu0 %v333
        %v524 = vpop.f32.mrb[0].mxu0
        %v525 = vadd.f32 0.0, %v524
        %v526 = vpop.f32.mrb[0].mxu0
        %v527 = vadd.f32 0.0, %v526
        %528 = vmatprep.mubr.f32.mxu0 0.0
        %529 = vmatmul.mubr.f32.gmra.mrb[0].mxu0 %v336
        %v530 = vpop.f32.mrb[0].mxu0
        %v531 = vadd.f32 0.0, %v530
        %v532 = vpop.f32.mrb[0].mxu0
        %v533 = vadd.f32 0.0, %v532
        %534 = vmatprep.mubr.f32.mxu0 0.0
        %535 = vmatmul.mubr.f32.gmra.mrb[0].mxu0 %v339
        %v536 = vpop.f32.mrb[0].mxu0
        %v537 = vadd.f32 0.0, %v536
        %v538 = vpop.f32.mrb[0].mxu0
        %v539 = vadd.f32 0.0, %v538
        %540 = vmatprep.mubr.f32.mxu0 0.0
        %541 = vmatmul.mubr.f32.gmra.mrb[0].mxu0 %v342
        %v542 = vpop.f32.mrb[0].mxu0
        %v543 = vadd.f32 0.0, %v542
        %v544 = vpop.f32.mrb[0].mxu0
        %v545 = vadd.f32 0.0, %v544
        %546 = vmatprep.mubr.f32.mxu0 0.0
        %547 = vmatmul.mubr.f32.gmra.mrb[0].mxu0 %v345
        %v548 = vpop.f32.mrb[0].mxu0
        %v549 = vadd.f32 0.0, %v548
        %v550 = vpop.f32.mrb[0].mxu0
        %v551 = vadd.f32 0.0, %v550
        %552 = vmatprep.mubr.f32.mxu0 0.0
        %553 = vmatmul.mubr.f32.gmra.mrb[0].mxu0 %v348
        %v554 = vpop.f32.mrb[0].mxu0
        %v555 = vadd.f32 0.0, %v554
        %v556 = vpop.f32.mrb[0].mxu0
        %v557 = vadd.f32 0.0, %v556
        %558 = vmatprep.mubr.f32.mxu0 0.0
        %559 = vmatmul.mubr.f32.gmra.mrb[0].mxu0 %v351
        %v560 = vpop.f32.mrb[0].mxu0
        %v561 = vadd.f32 0.0, %v560
        %v562 = vpop.f32.mrb[0].mxu0
        %v563 = vadd.f32 0.0, %v562
        %564 = vmatprep.mubr.f32.mxu0 0.0
        %565 = vmatmul.mubr.f32.gmra.mrb[0].mxu0 %v354
        %v566 = vpop.f32.mrb[0].mxu0
        %v567 = vadd.f32 0.0, %v566
        %v568 = vpop.f32.mrb[0].mxu0
        %v569 = vadd.f32 0.0, %v568
        %570 = vmatprep.mubr.f32.mxu0 0.0
        %571 = vmatmul.mubr.f32.gmra.mrb[0].mxu0 %v357
        %v572 = vpop.f32.mrb[0].mxu0
        %v573 = vadd.f32 0.0, %v572
        %v574 = vpop.f32.mrb[0].mxu0
        %v575 = vadd.f32 0.0, %v574
        %576 = vmatprep.mubr.f32.mxu0 0.0
        %577 = vmatmul.mubr.f32.gmra.mrb[0].mxu0 %v360
        %v578 = vpop.f32.mrb[0].mxu0
        %v579 = vadd.f32 0.0, %v578
        %v580 = vpop.f32.mrb[0].mxu0
        %v581 = vadd.f32 0.0, %v580
        %582 = vmatprep.mubr.f32.mxu0 0.0
        %583 = vmatmul.mubr.f32.gmra.mrb[0].mxu0 %v363
        %v584 = vpop.f32.mrb[0].mxu0
        %v585 = vadd.f32 0.0, %v584
        %v586 = vpop.f32.mrb[0].mxu0
        %v587 = vadd.f32 0.0, %v586
        %588 = vmatprep.mubr.f32.mxu0 0.0
        %589 = vmatmul.mubr.f32.gmra.mrb[0].mxu0 %v366
        %v590 = vpop.f32.mrb[0].mxu0
        %v591 = vadd.f32 0.0, %v590
        %v592 = vpop.f32.mrb[0].mxu0
        %v593 = vadd.f32 0.0, %v592
        %594 = vmatprep.mubr.f32.mxu0 0.0
        %595 = vmatmul.mubr.f32.gmra.mrb[0].mxu0 %v369
        %v596 = vpop.f32.mrb[0].mxu0
        %v597 = vadd.f32 0.0, %v596
        %v598 = vpop.f32.mrb[0].mxu0
        %v599 = vadd.f32 0.0, %v598
        %600 = vmatprep.mubr.f32.mxu0 0.0
        %601 = vmatmul.mubr.f32.gmra.mrb[0].mxu0 %v372
        %v602 = vpop.f32.mrb[0].mxu0
        %v603 = vadd.f32 0.0, %v602
        %v604 = vpop.f32.mrb[0].mxu0
        %v605 = vadd.f32 0.0, %v604
        %606 = vmatprep.mubr.f32.mxu0 0.0
        %607 = vmatmul.mubr.f32.gmra.mrb[0].mxu0 %v375
        %v608 = vpop.f32.mrb[0].mxu0
        %v609 = vadd.f32 0.0, %v608
        %v610 = vpop.f32.mrb[0].mxu0
        %v611 = vadd.f32 0.0, %v610
        %612 = vmatprep.mubr.f32.mxu0 0.0
        %613 = vmatmul.mubr.f32.gmra.mrb[0].mxu0 %v378
        %v614 = vpop.f32.mrb[0].mxu0
        %v615 = vadd.f32 0.0, %v614
        %v616 = vpop.f32.mrb[0].mxu0
        %v617 = vadd.f32 0.0, %v616
        %618 = vmatprep.mubr.f32.mxu0 0.0
        %619 = vmatmul.mubr.f32.gmra.mrb[0].mxu0 %v381
        %v620 = vpop.f32.mrb[0].mxu0
        %v621 = vadd.f32 0.0, %v620
        %v622 = vpop.f32.mrb[0].mxu0
        %v623 = vadd.f32 0.0, %v622
        %624 = vmatprep.mubr.f32.mxu0 0.0
        %625 = vmatmul.mubr.f32.gmra.mrb[0].mxu0 %v384
        %v626 = vpop.f32.mrb[0].mxu0
        %v627 = vadd.f32 0.0, %v626
        %v628 = vpop.f32.mrb[0].mxu0
        %v629 = vadd.f32 0.0, %v628
        %630 = vmatprep.mubr.f32.mxu0 0.0
        %631 = vmatmul.mubr.f32.gmra.mrb[0].mxu0 %v387
        %v632 = vpop.f32.mrb[0].mxu0
        %v633 = vadd.f32 0.0, %v632
        %v634 = vpop.f32.mrb[0].mxu0
        %v635 = vadd.f32 0.0, %v634
        %636 = vmatprep.mubr.f32.mxu0 0.0
        %637 = vmatmul.mubr.f32.gmra.mrb[0].mxu0 %v390
        %v638 = vpop.f32.mrb[0].mxu0
        %v639 = vadd.f32 0.0, %v638
        %v640 = vpop.f32.mrb[0].mxu0
        %v641 = vadd.f32 0.0, %v640
        %642 = vmatprep.mubr.f32.mxu0 0.0
        %643 = vmatmul.mubr.f32.gmra.mrb[0].mxu0 %v393
        %v644 = vpop.f32.mrb[0].mxu0
        %v645 = vadd.f32 0.0, %v644
        %v646 = vpop.f32.mrb[0].mxu0
        %v647 = vadd.f32 0.0, %v646
        %648 = vmatprep.mubr.f32.mxu0 0.0
        %649 = vmatmul.mubr.f32.gmra.mrb[0].mxu0 %v396
        %v650 = vpop.f32.mrb[0].mxu0
        %v651 = vadd.f32 0.0, %v650
        %v652 = vpop.f32.mrb[0].mxu0
        %v653 = vadd.f32 0.0, %v652
        %654 = vdwg.mxu0
        %655 = vst [vmem:[%s228] sm:$0xff] %v465
        %656 = vst [vmem:[%s228 + $0x8] sm:$0xff] %v467
        %657 = vst [vmem:[%s228 + $0x10] sm:$0xff] %v471
        %658 = vst [vmem:[%s228 + $0x18] sm:$0xff] %v473
        %659 = vst [vmem:[%s228 + $0x20] sm:$0xff] %v477
        %660 = vst [vmem:[%s228 + $0x28] sm:$0xff] %v479
        %661 = vst [vmem:[%s228 + $0x30] sm:$0xff] %v483
        %662 = vst [vmem:[%s228 + $0x38] sm:$0xff] %v485
        %663 = vst [vmem:[%s228 + $0x40] sm:$0xff] %v489
        %664 = vst [vmem:[%s228 + $0x48] sm:$0xff] %v491
        %665 = vst [vmem:[%s228 + $0x50] sm:$0xff] %v495
        %666 = vst [vmem:[%s228 + $0x58] sm:$0xff] %v497
        %667 = vst [vmem:[%s228 + $0x60] sm:$0xff] %v501
        %668 = vst [vmem:[%s228 + $0x68] sm:$0xff] %v503
        %669 = vst [vmem:[%s228 + $0x70] sm:$0xff] %v507
        %670 = vst [vmem:[%s228 + $0x78] sm:$0xff] %v509
        %671 = vst [vmem:[%s228 + $0x80] sm:$0xff] %v513
        %672 = vst [vmem:[%s228 + $0x88] sm:$0xff] %v515
        %673 = vst [vmem:[%s228 + $0x90] sm:$0xff] %v519
        %674 = vst [vmem:[%s228 + $0x98] sm:$0xff] %v521
        %675 = vst [vmem:[%s228 + $0xa0] sm:$0xff] %v525
        %676 = vst [vmem:[%s228 + $0xa8] sm:$0xff] %v527
        %677 = vst [vmem:[%s228 + $0xb0] sm:$0xff] %v531
        %678 = vst [vmem:[%s228 + $0xb8] sm:$0xff] %v533
        %679 = vst [vmem:[%s228 + $0xc0] sm:$0xff] %v537
        %680 = vst [vmem:[%s228 + $0xc8] sm:$0xff] %v539
        %681 = vst [vmem:[%s228 + $0xd0] sm:$0xff] %v543
        %682 = vst [vmem:[%s228 + $0xd8] sm:$0xff] %v545
        %683 = vst [vmem:[%s228 + $0xe0] sm:$0xff] %v549
        %684 = vst [vmem:[%s228 + $0xe8] sm:$0xff] %v551
        %685 = vst [vmem:[%s228 + $0xf0] sm:$0xff] %v555
        %686 = vst [vmem:[%s228 + $0xf8] sm:$0xff] %v557
        %687 = vst [vmem:[%s228 + $0x100] sm:$0xff] %v561
        %688 = vst [vmem:[%s228 + $0x108] sm:$0xff] %v563
        %689 = vst [vmem:[%s228 + $0x110] sm:$0xff] %v567
        %690 = vst [vmem:[%s228 + $0x118] sm:$0xff] %v569
        %691 = vst [vmem:[%s228 + $0x120] sm:$0xff] %v573
        %692 = vst [vmem:[%s228 + $0x128] sm:$0xff] %v575
        %693 = vst [vmem:[%s228 + $0x130] sm:$0xff] %v579
        %694 = vst [vmem:[%s228 + $0x138] sm:$0xff] %v581
        %695 = vst [vmem:[%s228 + $0x140] sm:$0xff] %v585
        %696 = vst [vmem:[%s228 + $0x148] sm:$0xff] %v587
        %697 = vst [vmem:[%s228 + $0x150] sm:$0xff] %v591
        %698 = vst [vmem:[%s228 + $0x158] sm:$0xff] %v593
        %699 = vst [vmem:[%s228 + $0x160] sm:$0xff] %v597
        %700 = vst [vmem:[%s228 + $0x168] sm:$0xff] %v599
        %701 = vst [vmem:[%s228 + $0x170] sm:$0xff] %v603
        %702 = vst [vmem:[%s228 + $0x178] sm:$0xff] %v605
        %703 = vst [vmem:[%s228 + $0x180] sm:$0xff] %v609
        %704 = vst [vmem:[%s228 + $0x188] sm:$0xff] %v611
        %705 = vst [vmem:[%s228 + $0x190] sm:$0xff] %v615
        %706 = vst [vmem:[%s228 + $0x198] sm:$0xff] %v617
        %707 = vst [vmem:[%s228 + $0x1a0] sm:$0xff] %v621
        %708 = vst [vmem:[%s228 + $0x1a8] sm:$0xff] %v623
        %709 = vst [vmem:[%s228 + $0x1b0] sm:$0xff] %v627
        %710 = vst [vmem:[%s228 + $0x1b8] sm:$0xff] %v629
        %711 = vst [vmem:[%s228 + $0x1c0] sm:$0xff] %v633
        %712 = vst [vmem:[%s228 + $0x1c8] sm:$0xff] %v635
        %713 = vst [vmem:[%s228 + $0x1d0] sm:$0xff] %v639
        %714 = vst [vmem:[%s228 + $0x1d8] sm:$0xff] %v641
        %715 = vst [vmem:[%s228 + $0x1e0] sm:$0xff] %v645
        %716 = vst [vmem:[%s228 + $0x1e8] sm:$0xff] %v647
        %717 = vst [vmem:[%s228 + $0x1f0] sm:$0xff] %v651
        %718 = vst [vmem:[%s228 + $0x1f8] sm:$0xff] %v653
        %s719 = sand.u32 %s109, 1
        %s720 = scalar_lea.sflag [#allocation4], %s719
        %s721 = sand.u32 %s109, 1
        %s722 = smul.addr %s721, 512
        %s723 = scalar_lea.vmem [#allocation7], %s722
        // Predicated region
        $region37: #{tpu_custom_call.1} parent=27 // pred_check
          %p724 = pneg %p119
        $region38: #{tpu_custom_call.1} parent=27 // pred_check_branch
          %726 = sbr.rel (%p724) target = $region40
        $region39: #{tpu_custom_call.1} parent=27 // pred_region
          %s727 = smul.u32 32, %s28
          %s728 = smul.u32 2, %s29
          %s730 = ssub.s32 8192, 8192
          %731 = vsyncadd %s720, %s730
          %s732 = smul.addr %s727, 2
          %s733 = sadd.s32 %s728, %s732
          %s734 = smul.addr %s27, 64
          %s735 = sadd.s32 %s733, %s734
          %s736 = smul.addr %s735, 128
          %s737 = scalar_lea.hbm %s2, %s736
          %s738 = sshll.u32 %s723, 4
          %s739 = int_to_ptr.vmem [resolvable:$true] %s738
          %744 = dma.vmem_to_hbm [thread:$0]  %s739, 8192, %s737, %s720, 256, 256, 16
        $region40: #{tpu_custom_call.1} parent=27 // pred_fallthru
          _
      $region28: #{tpu_custom_call.1} parent=5 // pred_fallthru
        _
      %p745 = scmp.le.s32.totalorder 2, %s17
      // Predicated region
      $region41: #{tpu_custom_call.1} parent=5 // pred_check
        %p746 = pneg %p745
      $region42: #{tpu_custom_call.1} parent=5 // pred_check_branch
        %748 = sbr.rel (%p746) target = $region44
      $region43: #{tpu_custom_call.1} parent=5 // pred_region
        %s749 = ssub.s32 %s17, 2
        // Predicated region
        $region45: #{tpu_custom_call.1} parent=43 // pred_check
          %p750 = pneg %p125
        $region46: #{tpu_custom_call.1} parent=43 // pred_check_branch
          %752 = sbr.rel (%p750) target = $region48
        $region47: #{tpu_custom_call.1} parent=43 // pred_region
          %s753 = sand.u32 %s110, 1
          %s754 = scalar_lea.sflag [#allocation4], %s753
          %s755 = sand.u32 %s110, 1
          %s756 = smul.addr %s755, 512
          %s757 = scalar_lea.vmem [#allocation7], %s756
          %758 = dma.done %s754, 8192
        $region48: #{tpu_custom_call.1} parent=43 // pred_fallthru
          _
      $region44: #{tpu_custom_call.1} parent=5 // pred_fallthru
        _
    $region6: #{tpu_custom_call.1} parent=1 // loop_footer
      %s21 = sadd.s32 1, %s17
    $region7: #{tpu_custom_call.1} parent=1 // loop_footer_branch
      %16 = sbr.rel target = $region3
    $region8: #{tpu_custom_call.1} parent=1 // loop_exit
      _
    %759 = vsyncpa [#allocation3], 1
    %s760 = scalar_lea.sflag [#allocation3], 1
    %761 = vsyncpa %s760, 1
    %762 = vsyncpa [#allocation6], 1
    %s763 = scalar_lea.sflag [#allocation6], 1
    %764 = vsyncpa %s763, 1
    %765 = vsyncpa [#allocation4], 1
    %s766 = scalar_lea.sflag [#allocation4], 1
    %767 = vsyncpa %s766, 1

</llo_original>
